<compile_context>
chip_gen: v7x
topology: tpu7x:2x2x1
jax: 0.10.0
libtpu: 0.0.40
codegen_flags: <defaults>
</compile_context>

<pallas_src>
import functools

import jax
import jax.numpy as jnp
from jax.experimental import pallas as pl
from jax.experimental.pallas import tpu as pltpu


def _round_up(x, m):
    return (x + m - 1) // m * m


def bert_self_output_kernel(h_ref, w_ref, b_ref, x_ref, g_ref, beta_ref, o_ref,
                            *, eps, h_valid):
    # dense: (tm, Hp) @ (Hp, Hp), bf16 (or f32) inputs, f32 accumulation on MXU
    y = jnp.dot(h_ref[...], w_ref[...], preferred_element_type=jnp.float32)
    # bias + dropout(eval: identity) + residual, all in f32
    z = y + b_ref[...].astype(jnp.float32) + x_ref[...].astype(jnp.float32)

    hp = z.shape[-1]
    inv_h = 1.0 / h_valid
    if h_valid != hp:
        # padded lanes must not contribute to LayerNorm statistics
        lane = jax.lax.broadcasted_iota(jnp.int32, (1, hp), 1)
        mask = lane < h_valid
        mean = jnp.sum(jnp.where(mask, z, 0.0), axis=-1, keepdims=True) * inv_h
        zc = z - mean
        var = jnp.sum(jnp.where(mask, zc * zc, 0.0), axis=-1, keepdims=True) * inv_h
    else:
        mean = jnp.sum(z, axis=-1, keepdims=True) * inv_h
        zc = z - mean
        var = jnp.sum(zc * zc, axis=-1, keepdims=True) * inv_h

    zn = zc * jax.lax.rsqrt(var + eps)
    out = zn * g_ref[...].astype(jnp.float32) + beta_ref[...].astype(jnp.float32)
    o_ref[...] = out.astype(o_ref.dtype)


def _pad_2d(x, rows, cols, dtype):
    """Cast to dtype and zero-pad to (rows, cols) only if needed."""
    x = x.astype(dtype)
    r, c = x.shape
    if r == rows and c == cols:
        return x
    return jnp.zeros((rows, cols), dtype).at[:r, :c].set(x)


def bert_self_output(hidden_states, input_tensor, weight, bias, gamma, beta,
                     *, eps=1e-12, tm=256, matmul_dtype=jnp.bfloat16):
    """hidden_states, input_tensor: (B, S, H); weight: (H, H)=(in,out). Returns (B, S, H)."""
    B, S, H = hidden_states.shape
    assert input_tensor.shape == (B, S, H)
    assert weight.shape == (H, H)
    M = B * S
    out_dtype = hidden_states.dtype
    res_dtype = input_tensor.dtype

    # ---- tiling / padding (lane-dense output, MXU-friendly row tiles) ----
    tm_eff = min(int(tm), _round_up(M, 16))
    tm_eff = _round_up(tm_eff, 16)
    Mp = _round_up(M, tm_eff)
    Hp = _round_up(H, 128)

    mm_dtype = matmul_dtype if matmul_dtype is not None else hidden_states.dtype

    h2 = _pad_2d(hidden_states.reshape(M, H), Mp, Hp, mm_dtype)
    w2 = _pad_2d(weight, Hp, Hp, mm_dtype)
    x2 = _pad_2d(input_tensor.reshape(M, H), Mp, Hp, res_dtype)
    b2 = _pad_2d(bias.reshape(1, H), 1, Hp, jnp.float32)
    g2 = _pad_2d(gamma.reshape(1, H), 1, Hp, jnp.float32)
    be2 = _pad_2d(beta.reshape(1, H), 1, Hp, jnp.float32)

    kernel = functools.partial(bert_self_output_kernel, eps=eps, h_valid=H)
    grid = (Mp // tm_eff,)

    # ---- VMEM budget / scheduler cost hint ----
    itm = jnp.dtype(mm_dtype).itemsize
    itr = jnp.dtype(res_dtype).itemsize
    ito = jnp.dtype(out_dtype).itemsize
    act_tile = tm_eff * Hp
    vmem_need = (2 * act_tile * itm        # double-buffered activation tiles
                 + 2 * Hp * Hp * itm       # resident weight (double-buffer bound)
                 + 2 * act_tile * itr      # residual tiles
                 + 2 * act_tile * ito      # output tiles
                 + 6 * Hp * 4)             # bias/gamma/beta
    vmem_limit = int(min(max(vmem_need + (8 << 20), 32 << 20), 100 << 20))

    cost = pl.CostEstimate(
        flops=2 * Mp * Hp * Hp + 10 * Mp * Hp,
        transcendentals=Mp,
        bytes_accessed=(h2.size * itm + w2.size * itm + x2.size * itr
                        + (b2.size + g2.size + be2.size) * 4
                        + Mp * Hp * ito),
    )

    out = pl.pallas_call(
        kernel,
        out_shape=jax.ShapeDtypeStruct((Mp, Hp), out_dtype),
        grid_spec=pltpu.PrefetchScalarGridSpec(
            num_scalar_prefetch=0,
            grid=grid,
            in_specs=[
                pl.BlockSpec((tm_eff, Hp), lambda i: (i, 0)),   # activations
                pl.BlockSpec((Hp, Hp), lambda i: (0, 0)),       # weight (VMEM-resident)
                pl.BlockSpec((1, Hp), lambda i: (0, 0)),        # bias
                pl.BlockSpec((tm_eff, Hp), lambda i: (i, 0)),   # residual input
                pl.BlockSpec((1, Hp), lambda i: (0, 0)),        # LN gamma
                pl.BlockSpec((1, Hp), lambda i: (0, 0)),        # LN beta
            ],
            out_specs=pl.BlockSpec((tm_eff, Hp), lambda i: (i, 0)),
        ),
        compiler_params=pltpu.CompilerParams(
            dimension_semantics=("parallel",),
            vmem_limit_bytes=vmem_limit),
        cost_estimate=cost,
    )(h2, w2, b2, x2, g2, be2)

    if Mp != M or Hp != H:
        out = out[:M, :H]
    return out.reshape(B, S, H)


if __name__ == "__main__":
    batch, seq, hidden = 2, 8, 32
    eps = 1e-12

    key = jax.random.PRNGKey(0)
    k1, k2, k3, k4 = jax.random.split(key, 4)

    hidden_states = jax.random.normal(k1, (batch, seq, hidden), jnp.float32)
    input_tensor = jax.random.normal(k2, (batch, seq, hidden), jnp.float32)

    bound = 1.0 / (hidden ** 0.5)
    # weight stored (in_features, out_features): transpose of nn.Linear.weight
    weight = jax.random.uniform(k3, (hidden, hidden), jnp.float32, -bound, bound)
    bias = jax.random.uniform(k4, (hidden,), jnp.float32, -bound, bound)
    gamma = jnp.ones((hidden,), jnp.float32)
    beta = jnp.zeros((hidden,), jnp.float32)

    out = bert_self_output(hidden_states, input_tensor, weight, bias, gamma, beta, eps=eps)
    jax.block_until_ready(out)

    # reference in plain JAX (same bf16 matmul inputs, f32 everywhere else)
    h2 = hidden_states.reshape(-1, hidden)
    y = jnp.dot(h2.astype(jnp.bfloat16), weight.astype(jnp.bfloat16),
                preferred_element_type=jnp.float32) + bias
    z = y + input_tensor.reshape(-1, hidden)
    mean = z.mean(-1, keepdims=True)
    var = ((z - mean) ** 2).mean(-1, keepdims=True)
    ref = ((z - mean) * jax.lax.rsqrt(var + eps)) * gamma + beta
    ref = ref.reshape(batch, seq, hidden)

    err = float(jnp.max(jnp.abs(out - ref)))
    assert jnp.allclose(out, ref, atol=1e-2, rtol=1e-2), err

    print("KERNEL_OK")
</pallas_src>

<mosaic_0001>
module attributes {stable_mosaic.version = 11 : i64} {
  func.func @bert_self_output_kernel(%arg0: i32, %arg1: memref<16x128xbf16, #tpu.memory_space<vmem>>, %arg2: memref<128x128xbf16, #tpu.memory_space<vmem>>, %arg3: memref<1x128xf32, #tpu.memory_space<vmem>>, %arg4: memref<16x128xf32, #tpu.memory_space<vmem>>, %arg5: memref<1x128xf32, #tpu.memory_space<vmem>>, %arg6: memref<1x128xf32, #tpu.memory_space<vmem>>, %arg7: memref<16x128xf32, #tpu.memory_space<vmem>>) attributes {dimension_semantics = [#tpu.dimension_semantics<parallel>], iteration_bounds = array<i64: 1>, scalar_prefetch = 0 : i64, scratch_operands = 0 : i64, tpu.core_type = #tpu.core_type<tc>, window_params = [{transform_indices = @transform_0, window_bounds = array<i64: 16, 128>}, {pipeline_mode = #tpu.pipeline_mode<synchronous>, transform_indices = @transform_1, window_bounds = array<i64: 128, 128>}, {pipeline_mode = #tpu.pipeline_mode<synchronous>, transform_indices = @transform_2, window_bounds = array<i64: 1, 128>}, {transform_indices = @transform_3, window_bounds = array<i64: 16, 128>}, {pipeline_mode = #tpu.pipeline_mode<synchronous>, transform_indices = @transform_4, window_bounds = array<i64: 1, 128>}, {pipeline_mode = #tpu.pipeline_mode<synchronous>, transform_indices = @transform_5, window_bounds = array<i64: 1, 128>}, {transform_indices = @transform_6, window_bounds = array<i64: 16, 128>}]} {
    %c0 = arith.constant 0 : index
    %c0_0 = arith.constant 0 : index
    %0 = vector.load %arg1[%c0, %c0_0] : memref<16x128xbf16, #tpu.memory_space<vmem>>, vector<16x128xbf16>
    %c0_1 = arith.constant 0 : index
    %c0_2 = arith.constant 0 : index
    %1 = vector.load %arg2[%c0_1, %c0_2] : memref<128x128xbf16, #tpu.memory_space<vmem>>, vector<128x128xbf16>
    %cst = arith.constant dense<0.000000e+00> : vector<16x128xf32>
    %2 = tpu.matmul %0, %1, %cst {dimension_numbers = #tpu.dot_dimension_numbers<[1], [0], [0], [1], [0, 0, 1, 1], [], []>} : vector<16x128xbf16>, vector<128x128xbf16>, vector<16x128xf32> -> vector<16x128xf32>
    %c0_3 = arith.constant 0 : index
    %c0_4 = arith.constant 0 : index
    %3 = vector.load %arg3[%c0_3, %c0_4] : memref<1x128xf32, #tpu.memory_space<vmem>>, vector<1x128xf32>
    %4 = vector.broadcast %3 : vector<1x128xf32> to vector<16x128xf32>
    %5 = arith.addf %2, %4 : vector<16x128xf32>
    %c0_5 = arith.constant 0 : index
    %c0_6 = arith.constant 0 : index
    %6 = vector.load %arg4[%c0_5, %c0_6] : memref<16x128xf32, #tpu.memory_space<vmem>>, vector<16x128xf32>
    %7 = arith.addf %5, %6 : vector<16x128xf32>
    %8 = tpu.iota {dimensions = array<i32: 1>} : vector<1x128xi32>
    %c32_i32 = arith.constant 32 : i32
    %9 = vector.broadcast %c32_i32 : i32 to vector<1x128xi32>
    %10 = arith.cmpi slt, %8, %9 : vector<1x128xi32>
    %cst_7 = arith.constant 0.000000e+00 : f32
    %11 = vector.shape_cast %10 : vector<1x128xi1> to vector<1x128xi1>
    %12 = vector.broadcast %11 : vector<1x128xi1> to vector<16x128xi1>
    %13 = vector.broadcast %cst_7 : f32 to vector<16x128xf32>
    %14 = arith.select %12, %7, %13 : vector<16x128xi1>, vector<16x128xf32>
    %cst_8 = arith.constant dense<0.000000e+00> : vector<16xf32>
    %15 = vector.multi_reduction <add>, %14, %cst_8 [1] : vector<16x128xf32> to vector<16xf32>
    %16 = vector.shape_cast %15 : vector<16xf32> to vector<16x1xf32>
    %cst_9 = arith.constant 3.125000e-02 : f32
    %17 = vector.broadcast %cst_9 : f32 to vector<16x1xf32>
    %18 = arith.mulf %16, %17 : vector<16x1xf32>
    %19 = vector.broadcast %18 : vector<16x1xf32> to vector<16x128xf32>
    %20 = arith.subf %7, %19 : vector<16x128xf32>
    %21 = arith.mulf %20, %20 : vector<16x128xf32>
    %cst_10 = arith.constant 0.000000e+00 : f32
    %22 = vector.shape_cast %10 : vector<1x128xi1> to vector<1x128xi1>
    %23 = vector.broadcast %22 : vector<1x128xi1> to vector<16x128xi1>
    %24 = vector.broadcast %cst_10 : f32 to vector<16x128xf32>
    %25 = arith.select %23, %21, %24 : vector<16x128xi1>, vector<16x128xf32>
    %cst_11 = arith.constant dense<0.000000e+00> : vector<16xf32>
    %26 = vector.multi_reduction <add>, %25, %cst_11 [1] : vector<16x128xf32> to vector<16xf32>
    %27 = vector.shape_cast %26 : vector<16xf32> to vector<16x1xf32>
    %cst_12 = arith.constant 3.125000e-02 : f32
    %28 = vector.broadcast %cst_12 : f32 to vector<16x1xf32>
    %29 = arith.mulf %27, %28 : vector<16x1xf32>
    %cst_13 = arith.constant 9.99999996E-13 : f32
    %30 = vector.broadcast %cst_13 : f32 to vector<16x1xf32>
    %31 = arith.addf %29, %30 : vector<16x1xf32>
    %32 = math.rsqrt %31 : vector<16x1xf32>
    %33 = vector.broadcast %32 : vector<16x1xf32> to vector<16x128xf32>
    %34 = arith.mulf %20, %33 : vector<16x128xf32>
    %c0_14 = arith.constant 0 : index
    %c0_15 = arith.constant 0 : index
    %35 = vector.load %arg5[%c0_14, %c0_15] : memref<1x128xf32, #tpu.memory_space<vmem>>, vector<1x128xf32>
    %36 = vector.broadcast %35 : vector<1x128xf32> to vector<16x128xf32>
    %37 = arith.mulf %34, %36 : vector<16x128xf32>
    %c0_16 = arith.constant 0 : index
    %c0_17 = arith.constant 0 : index
    %38 = vector.load %arg6[%c0_16, %c0_17] : memref<1x128xf32, #tpu.memory_space<vmem>>, vector<1x128xf32>
    %39 = vector.broadcast %38 : vector<1x128xf32> to vector<16x128xf32>
    %40 = arith.addf %37, %39 : vector<16x128xf32>
    %c0_18 = arith.constant 0 : index
    %c0_19 = arith.constant 0 : index
    %41 = vector.load %arg7[%c0_18, %c0_19] : memref<16x128xf32, #tpu.memory_space<vmem>>, vector<16x128xf32>
    tpu.vector_store %arg7[%c0_18, %c0_19], %40 {strides = array<i32>} : memref<16x128xf32, #tpu.memory_space<vmem>>, vector<16x128xf32>,
    return
  }
  func.func @transform_0(%arg0: i32) -> (i32, i32) {
    %c0_i32 = arith.constant 0 : i32
    %c0_i32_0 = arith.constant 0 : i32
    return %arg0, %c0_i32 : i32, i32
  }
  func.func @transform_1(%arg0: i32) -> (i32, i32) {
    %c0_i32 = arith.constant 0 : i32
    %c0_i32_0 = arith.constant 0 : i32
    %c0_i32_1 = arith.constant 0 : i32
    return %c0_i32, %c0_i32_0 : i32, i32
  }
  func.func @transform_2(%arg0: i32) -> (i32, i32) {
    %c0_i32 = arith.constant 0 : i32
    %c0_i32_0 = arith.constant 0 : i32
    %c0_i32_1 = arith.constant 0 : i32
    return %c0_i32, %c0_i32_0 : i32, i32
  }
  func.func @transform_3(%arg0: i32) -> (i32, i32) {
    %c0_i32 = arith.constant 0 : i32
    %c0_i32_0 = arith.constant 0 : i32
    return %arg0, %c0_i32 : i32, i32
  }
  func.func @transform_4(%arg0: i32) -> (i32, i32) {
    %c0_i32 = arith.constant 0 : i32
    %c0_i32_0 = arith.constant 0 : i32
    %c0_i32_1 = arith.constant 0 : i32
    return %c0_i32, %c0_i32_0 : i32, i32
  }
  func.func @transform_5(%arg0: i32) -> (i32, i32) {
    %c0_i32 = arith.constant 0 : i32
    %c0_i32_0 = arith.constant 0 : i32
    %c0_i32_1 = arith.constant 0 : i32
    return %c0_i32, %c0_i32_0 : i32, i32
  }
  func.func @transform_6(%arg0: i32) -> (i32, i32) {
    %c0_i32 = arith.constant 0 : i32
    %c0_i32_0 = arith.constant 0 : i32
    return %arg0, %c0_i32 : i32, i32
  }
}

</mosaic_0001>

<llo_original>
// kernel: tpu_custom_call.1
$region0: #{tpu_custom_call.1}
  #allocation0 [shape = 'u32[]', space=smem, size = 0x4, offset = 0x4, fixed_abs, tag = 'smem constant byte address 0x4 - core index']
  #allocation1 [shape = 'u32[144,128]{1,0:T(1,128)}', space=vmem, size = 0x12000, scoped, tag = 'internal scratch']
  %s0 = inlined_call_operand.hbm [shape: bf16[16,128], index: 0, kind: input, shape index: {}]
  %s1 = inlined_call_operand.hbm [shape: bf16[128,128], index: 1, kind: input, shape index: {}]
  %s2 = inlined_call_operand.vmem [shape: f32[1,128], index: 2, kind: input, shape index: {}]
  %s3 = inlined_call_operand.hbm [shape: f32[16,128], index: 3, kind: input, shape index: {}]
  %s4 = inlined_call_operand.vmem [shape: f32[1,128], index: 4, kind: input, shape index: {}]
  %s5 = inlined_call_operand.vmem [shape: f32[1,128], index: 5, kind: input, shape index: {}]
  %s6 = inlined_call_operand.hbm [shape: f32[16,128], index: 6, kind: output, shape index: {}]
  %s7 = sld [smem:[#allocation0]]
  $region46: #{tpu_custom_call.1} parent=0
    _
  %s9 = ssub.s32 1, %s7
  %s10 = scalar_select 0, %s9, %s7
  $region1: #{tpu_custom_call.1} parent=0
    #allocation2 [shape = 'u8[4096]{0}', space=vmem, size = 0x1000, scoped, tag = 'input window, operand 0, single buffered']
    #allocation3 [shape = 's32[1]{0}', space=sflag, size = 0x4, scoped, tag = 'scoped memory for tpu_custom_call.1']
    #allocation4 [shape = 's32[1]{0}', space=sflag, size = 0x4, scoped, tag = 'scoped memory for tpu_custom_call.1']
    #allocation5 [shape = 'u8[32768]{0}', space=vmem, size = 0x8000, scoped, tag = 'input window, operand 1, single buffered']
    #allocation6 [shape = 's32[1]{0}', space=sflag, size = 0x4, scoped, tag = 'scoped memory for tpu_custom_call.1']
    #allocation7 [shape = 'u8[8192]{0}', space=vmem, size = 0x2000, scoped, tag = 'input window, operand 3, single buffered']
    #allocation8 [shape = 'u8[8192]{0}', space=vmem, size = 0x2000, scoped, tag = 'output window, operand 0, single buffered']
    %11 = vsyncpa [#allocation3], 0
    %12 = vsyncpa [#allocation6], 0
    %13 = vsyncpa [#allocation4], 0
    // Predicated region
    $region2: #{tpu_custom_call.1} parent=1 // pred_check
      _
    $region3: #{tpu_custom_call.1} parent=1 // pred_check_branch
      %15 = sbr.rel (0) target = $region5
    $region4: #{tpu_custom_call.1} parent=1 // pred_region
      %s17 = ssub.s32 128, 128
      %18 = vsyncadd [#allocation3], %s17
      %s19 = sshll.u32 [#allocation2], 4
      %s20 = int_to_ptr.vmem [resolvable:$true] %s19
      %25 = dma.hbm_to_vmem [thread:$0]  %s0, 128, %s20, [#allocation3], 64, 64, 4
    $region5: #{tpu_custom_call.1} parent=1 // pred_fallthru
      _
    // Predicated region
    $region6: #{tpu_custom_call.1} parent=1 // pred_check
      _
    $region7: #{tpu_custom_call.1} parent=1 // pred_check_branch
      %27 = sbr.rel (0) target = $region9
    $region8: #{tpu_custom_call.1} parent=1 // pred_region
      %s29 = ssub.s32 1024, 1024
      %30 = vsyncadd [#allocation6], %s29
      %s31 = sshll.u32 [#allocation5], 4
      %s32 = int_to_ptr.vmem [resolvable:$true] %s31
      %37 = dma.hbm_to_vmem [thread:$0]  %s1, 1024, %s32, [#allocation6], 64, 64, 4
    $region9: #{tpu_custom_call.1} parent=1 // pred_fallthru
      _
    // Predicated region
    $region10: #{tpu_custom_call.1} parent=1 // pred_check
      _
    $region11: #{tpu_custom_call.1} parent=1 // pred_check_branch
      %39 = sbr.rel (0) target = $region13
    $region12: #{tpu_custom_call.1} parent=1 // pred_region
      _
    $region13: #{tpu_custom_call.1} parent=1 // pred_fallthru
      _
    // Predicated region
    $region14: #{tpu_custom_call.1} parent=1 // pred_check
      _
    $region15: #{tpu_custom_call.1} parent=1 // pred_check_branch
      %41 = sbr.rel (0) target = $region17
    $region16: #{tpu_custom_call.1} parent=1 // pred_region
      %s43 = ssub.s32 256, 256
      %44 = vsyncadd [#allocation6], %s43
      %s45 = sshll.u32 [#allocation7], 4
      %s46 = int_to_ptr.vmem [resolvable:$true] %s45
      %51 = dma.hbm_to_vmem [thread:$0]  %s3, 256, %s46, [#allocation6], 128, 128, 8
    $region17: #{tpu_custom_call.1} parent=1 // pred_fallthru
      _
    // Predicated region
    $region18: #{tpu_custom_call.1} parent=1 // pred_check
      _
    $region19: #{tpu_custom_call.1} parent=1 // pred_check_branch
      %53 = sbr.rel (0) target = $region21
    $region20: #{tpu_custom_call.1} parent=1 // pred_region
      _
    $region21: #{tpu_custom_call.1} parent=1 // pred_fallthru
      _
    // Predicated region
    $region22: #{tpu_custom_call.1} parent=1 // pred_check
      _
    $region23: #{tpu_custom_call.1} parent=1 // pred_check_branch
      %55 = sbr.rel (0) target = $region25
    $region24: #{tpu_custom_call.1} parent=1 // pred_region
      _
    $region25: #{tpu_custom_call.1} parent=1 // pred_fallthru
      _
    // Predicated region
    $region26: #{tpu_custom_call.1} parent=1 // pred_check
      _
    $region27: #{tpu_custom_call.1} parent=1 // pred_check_branch
      %57 = sbr.rel (0) target = $region29
    $region28: #{tpu_custom_call.1} parent=1 // pred_region
      %58 = dma.done [#allocation3], 128
    $region29: #{tpu_custom_call.1} parent=1 // pred_fallthru
      _
    // Predicated region
    $region30: #{tpu_custom_call.1} parent=1 // pred_check
      _
    $region31: #{tpu_custom_call.1} parent=1 // pred_check_branch
      %60 = sbr.rel (0) target = $region33
    $region32: #{tpu_custom_call.1} parent=1 // pred_region
      %61 = dma.done [#allocation6], 1024
    $region33: #{tpu_custom_call.1} parent=1 // pred_fallthru
      _
    // Predicated region
    $region34: #{tpu_custom_call.1} parent=1 // pred_check
      _
    $region35: #{tpu_custom_call.1} parent=1 // pred_check_branch
      %63 = sbr.rel (0) target = $region37
    $region36: #{tpu_custom_call.1} parent=1 // pred_region
      %64 = dma.done [#allocation6], 256
    $region37: #{tpu_custom_call.1} parent=1 // pred_fallthru
      _
    %v66 = vld [vmem:[#allocation2] sm:$0xf]
    %v67 = vld [vmem:[#allocation2 + $0x4] sm:$0xf]
    %v68 = vld [vmem:[#allocation5] sm:$0xf]
    %v69 = vld [vmem:[#allocation5 + $0x4] sm:$0xf]
    %v70 = vld [vmem:[#allocation5 + $0x8] sm:$0xf]
    %v71 = vld [vmem:[#allocation5 + $0xc] sm:$0xf]
    %v72 = vld [vmem:[#allocation5 + $0x10] sm:$0xf]
    %v73 = vld [vmem:[#allocation5 + $0x14] sm:$0xf]
    %v74 = vld [vmem:[#allocation5 + $0x18] sm:$0xf]
    %v75 = vld [vmem:[#allocation5 + $0x1c] sm:$0xf]
    %v76 = vld [vmem:[#allocation5 + $0x20] sm:$0xf]
    %v77 = vld [vmem:[#allocation5 + $0x24] sm:$0xf]
    %v78 = vld [vmem:[#allocation5 + $0x28] sm:$0xf]
    %v79 = vld [vmem:[#allocation5 + $0x2c] sm:$0xf]
    %v80 = vld [vmem:[#allocation5 + $0x30] sm:$0xf]
    %v81 = vld [vmem:[#allocation5 + $0x34] sm:$0xf]
    %v82 = vld [vmem:[#allocation5 + $0x38] sm:$0xf]
    %v83 = vld [vmem:[#allocation5 + $0x3c] sm:$0xf]
    %v84 = vld [vmem:[%s2] sm:$0x1]
    %v86 = vlaneseq
    %v87 = vshrl.u32 %v86, 7
    %v88 = vsub.s32 0, %v87
    %v89 = vrot.slane %v84, %v88
    %v93 = vunpack.c.l.b16 %v66
    %v94 = vunpack.c.l.b16 %v67
    %v95 = vpack.c.b16 %v94, %v93
    %v113 = vunpack.c.l.b16 %v68
    %v114 = vunpack.c.l.b16 %v69
    %v115 = vunpack.c.l.b16 %v70
    %v116 = vunpack.c.l.b16 %v71
    %v117 = vunpack.c.l.b16 %v72
    %v118 = vunpack.c.l.b16 %v73
    %v119 = vunpack.c.l.b16 %v74
    %v120 = vunpack.c.l.b16 %v75
    %v121 = vunpack.c.l.b16 %v76
    %v122 = vunpack.c.l.b16 %v77
    %v123 = vunpack.c.l.b16 %v78
    %v124 = vunpack.c.l.b16 %v79
    %v125 = vunpack.c.l.b16 %v80
    %v126 = vunpack.c.l.b16 %v81
    %v127 = vunpack.c.l.b16 %v82
    %v128 = vunpack.c.l.b16 %v83
    %v129 = vpack.c.b16 %v114, %v113
    %v130 = vpack.c.b16 %v116, %v115
    %v131 = vpack.c.b16 %v118, %v117
    %v132 = vpack.c.b16 %v120, %v119
    %v133 = vpack.c.b16 %v122, %v121
    %v134 = vpack.c.b16 %v124, %v123
    %v135 = vpack.c.b16 %v126, %v125
    %v136 = vpack.c.b16 %v128, %v127
    %145 = vmatprep.subr.bf16.mxu0 0
    %146 = vmatpush1.bf16.msra.mxu0 %v129
    %147 = vmatprep.subr.bf16.mxu0 0
    %148 = vmatpush1.bf16.msra.mxu0 %v130
    %149 = vmatprep.subr.bf16.mxu0 0
    %150 = vmatpush1.bf16.msra.mxu0 %v131
    %151 = vmatprep.subr.bf16.mxu0 0
    %152 = vmatpush1.bf16.msra.mxu0 %v132
    %153 = vmatprep.subr.bf16.mxu0 0
    %154 = vmatpush1.bf16.msra.mxu0 %v133
    %155 = vmatprep.subr.bf16.mxu0 0
    %156 = vmatpush1.bf16.msra.mxu0 %v134
    %157 = vmatprep.subr.bf16.mxu0 0
    %158 = vmatpush1.bf16.msra.mxu0 %v135
    %159 = vmatprep.subr.bf16.mxu0 0
    %160 = vmatpush1.bf16.msra.mxu0 %v136
    %161 = vmatprep.subr.bf16.mxu0 0
    %162 = vmatpush1.bf16.msra.mxu0 0
    %163 = vmatprep.subr.bf16.mxu0 0
    %164 = vmatpush1.bf16.msra.mxu0 0
    %165 = vmatprep.subr.bf16.mxu0 0
    %166 = vmatpush1.bf16.msra.mxu0 0
    %167 = vmatprep.subr.bf16.mxu0 0
    %168 = vmatpush1.bf16.msra.mxu0 0
    %169 = vmatprep.subr.bf16.mxu0 0
    %170 = vmatpush1.bf16.msra.mxu0 0
    %171 = vmatprep.subr.bf16.mxu0 0
    %172 = vmatpush1.bf16.msra.mxu0 0
    %173 = vmatprep.subr.bf16.mxu0 0
    %174 = vmatpush1.bf16.msra.mxu0 0
    %175 = vmatprep.subr.bf16.mxu0 0
    %176 = vmatpush1.bf16.msra.mxu0 0
    %177 = vmatprep.mubr.bf16.mxu0 0
    %178 = vmatmul.mubr.bf16.gmra.mrb[0].mxu0 %v95
    %v179 = vpop.f32.mrb[0].mxu0
    %v180 = vadd.f32 %v89, %v179
    %v181 = vpop.f32.mrb[0].mxu0
    %v182 = vpop.f32.mrb[0].mxu0
    %v183 = vadd.f32 %v89, %v182
    %v184 = vpop.f32.mrb[0].mxu0
    %185 = vdwg.mxu0
    %v186 = vld [vmem:[#allocation7] sm:$0xff]
    %v187 = vld [vmem:[#allocation7 + $0x8] sm:$0xff]
    %v188 = vadd.f32 %v180, %v186
    %v189 = vadd.f32 %v183, %v187
    %v190 = vlaneseq
    %v191 = vand.u32 %v190, 127
    %vm192 = vcmp.lt.s32.totalorder %v191, 32
    %v193 = vsel %vm192, 1, 0
    %vm194 = vcmp.eq.s32.totalorder %v193, 1
    %v195 = vsel %vm194, %v188, 0.0
    %v196 = vsel %vm194, %v189, 0.0
    %197 = vadd.xlane.f32.xlu0 %v195
    %v198 = vpop.xlane.xlu0 %197
    %199 = vadd.xlane.f32.xlu0 %v196
    %v200 = vpop.xlane.xlu0 %199
    %v201 = vmul.f32 %v198, 0.03125
    %v202 = vmul.f32 %v200, 0.03125
    %v203 = vsub.f32 %v188, %v201
    %v204 = vsub.f32 %v189, %v202
    %v205 = vmul.f32 %v203, %v203
    %v206 = vmul.f32 %v204, %v204
    %v207 = vsel %vm194, %v205, 0.0
    %v208 = vsel %vm194, %v206, 0.0
    %209 = vadd.xlane.f32.xlu0 %v207
    %v210 = vpop.xlane.xlu0 %209
    %211 = vadd.xlane.f32.xlu0 %v208
    %v212 = vpop.xlane.xlu0 %211
    %v213 = vmul.f32 %v210, 0.03125
    %v214 = vmul.f32 %v212, 0.03125
    %v215 = vadd.f32 %v213, 1e-12
    %v216 = vadd.f32 %v214, 1e-12
    %v217 = vrsqrt.pop %v215
    %v218 = vrsqrt.pop %v216
    %v219 = vmul.f32 %v203, %v217
    %v220 = vmul.f32 %v204, %v218
    %v221 = vld [vmem:[%s4] sm:$0x1]
    %v223 = vlaneseq
    %v224 = vshrl.u32 %v223, 7
    %v225 = vsub.s32 0, %v224
    %v226 = vrot.slane %v221, %v225
    %v228 = vmul.f32 %v219, %v226
    %v229 = vmul.f32 %v220, %v226
    %v230 = vld [vmem:[%s5] sm:$0x1]
    %v232 = vlaneseq
    %v233 = vshrl.u32 %v232, 7
    %v234 = vsub.s32 0, %v233
    %v235 = vrot.slane %v230, %v234
    %v237 = vadd.f32 %v228, %v235
    %v238 = vadd.f32 %v229, %v235
    %239 = vst [vmem:[#allocation8] sm:$0xff] %v237
    %240 = vst [vmem:[#allocation8 + $0x8] sm:$0xff] %v238
    // Predicated region
    $region38: #{tpu_custom_call.1} parent=1 // pred_check
      _
    $region39: #{tpu_custom_call.1} parent=1 // pred_check_branch
      %242 = sbr.rel (0) target = $region41
    $region40: #{tpu_custom_call.1} parent=1 // pred_region
      %s244 = ssub.s32 256, 256
      %245 = vsyncadd [#allocation4], %s244
      %s246 = sshll.u32 [#allocation8], 4
      %s247 = int_to_ptr.vmem [resolvable:$true] %s246
      %252 = dma.vmem_to_hbm [thread:$0]  %s247, 256, %s6, [#allocation4], 128, 128, 8
    $region41: #{tpu_custom_call.1} parent=1 // pred_fallthru
      _
    // Predicated region
    $region42: #{tpu_custom_call.1} parent=1 // pred_check
      _
    $region43: #{tpu_custom_call.1} parent=1 // pred_check_branch
      %254 = sbr.rel (0) target = $region45
    $region44: #{tpu_custom_call.1} parent=1 // pred_region
      %255 = dma.done [#allocation4], 256
    $region45: #{tpu_custom_call.1} parent=1 // pred_fallthru
      _
    %256 = vsyncpa [#allocation3], 1
    %257 = vsyncpa [#allocation6], 1
    %258 = vsyncpa [#allocation4], 1

</llo_original>
